<compile_context>
chip_gen: v5e
topology: v5e:2x2
jax: 0.10.0
libtpu: 0.0.40
codegen_flags: <defaults>
</compile_context>

<pallas_src>
import functools

import jax
import jax.numpy as jnp
from jax.experimental import pallas as pl
from jax.experimental.pallas import tpu as pltpu

HIDDEN = 32  # nn.Conv2d(num_states, 32, 3, padding=1)


# ----------------------------------------------------------------------------
# Pallas kernel: one CA step for Nb batch elements, fully lane-dense.
# ----------------------------------------------------------------------------
def _ca_kernel(xk_ref, w_ref, b_ref,
               y1_ref, y2_ref, y3_ref, y4_ref, y5_ref,
               *, ns, Nb, H, W):
    HW = H * W
    M = Nb * HW          # matmul "spatial" dim -> lanes
    K9 = 9 * ns          # full im2col contraction: 3x3 taps x Cin
    D = 2 * ns + 4       # fused head width: ns + (ns+1) + 1 + 1 + 1

    # --- 3x3 conv (padding=1) as ONE contraction of K=9*Cin, output (32, M) ---
    patch2d = xk_ref[...]                                   # (M, 9*Cin) im2col rows
    wc = w_ref[:HIDDEN, :K9]                                # (32, 9*Cin)
    # 'ck,mk->cm': lane-dense (32, M) result straight off the MXU.
    h = jax.lax.dot_general(
        wc, patch2d, (((1,), (1,)), ((), ())),
        preferred_element_type=jnp.float32)
    h = jnp.maximum(h + b_ref[:HIDDEN, :], 0.0)             # bias + ReLU (VPU)

    # --- all five 1x1 heads fused into one (D, 32) @ (32, M) matmul ----------
    wh = w_ref[HIDDEN:HIDDEN + D, :HIDDEN]                  # (D, 32)
    bh = b_ref[HIDDEN:HIDDEN + D, :]                        # (D, 1)
    head = jax.lax.dot_general(
        wh, h, (((1,), (0,)), ((), ())),
        preferred_element_type=jnp.float32) + bh            # (D, M), lane-dense

    # --- per-batch-element lane-dense stores + flattened-spatial softmaxes ---
    for b in range(Nb):                                     # static unroll
        hb = head[:, b * HW:(b + 1) * HW]                   # lane-aligned slice
        y1_ref[b] = hb[0:ns, :]                             # (ns,   HW)
        y2_ref[b] = hb[ns:2 * ns + 1, :]                    # (ns+1, HW)

        s = hb[2 * ns + 1:D, :]                             # (3, HW): conv3/4/5
        m = jnp.max(s, axis=1, keepdims=True)               # XLU lane reduce
        e = jnp.exp(s - m)                                  # EUP
        p = e * pl.reciprocal(jnp.sum(e, axis=1, keepdims=True), approx=True)
        y3_ref[b] = p[0:1, :]
        y4_ref[b] = p[1:2, :]
        y5_ref[b] = p[2:3, :]


# ----------------------------------------------------------------------------
# Wrapper: one CA step over the whole batch via pallas_call.
# ----------------------------------------------------------------------------
def _pick_nb(n):
    """Largest divisor of n that is <= 8 while keeping >= 2 grid steps
    (so megacore gets both TensorCores busy)."""
    best = 1
    for d in range(1, min(8, n) + 1):
        if n % d == 0 and (n // d >= 2 or n == 1):
            best = d
    return best


def _ca_step(x_nchw, wslab, bslab):
    N, ns, H, W = x_nchw.shape
    HW = H * W
    D = 2 * ns + 4
    KW = max(9 * ns, HIDDEN)
    Nb = _pick_nb(N)
    assert N % Nb == 0
    assert wslab.shape == (HIDDEN + D, KW), wslab.shape
    assert bslab.shape == (HIDDEN + D, 1), bslab.shape

    # im2col of the tiny input in the wrapper: pad spatially (SAME conv) and
    # stack the 9 (ky, kx)-shifted taps along channels.  This is cheap XLA work
    # on a few-KB tensor and lets the kernel do a single aligned K=9*Cin
    # contraction with no in-kernel unaligned slicing.
    x_nhwc = jnp.transpose(x_nchw.astype(jnp.float32), (0, 2, 3, 1))
    xpad = jnp.pad(x_nhwc, ((0, 0), (1, 1), (1, 1), (0, 0)))
    xk = jnp.concatenate(
        [xpad[:, ky:ky + H, kx:kx + W, :] for ky in range(3) for kx in range(3)],
        axis=-1)                                            # (N, H, W, 9*Cin)
    xk2d = xk.reshape(N * HW, 9 * ns)                       # rows = (n, y, x)

    kernel = functools.partial(_ca_kernel, ns=ns, Nb=Nb, H=H, W=W)

    return pl.pallas_call(
        kernel,
        out_shape=(
            jax.ShapeDtypeStruct((N, ns, HW), jnp.float32),
            jax.ShapeDtypeStruct((N, ns + 1, HW), jnp.float32),
            jax.ShapeDtypeStruct((N, 1, HW), jnp.float32),
            jax.ShapeDtypeStruct((N, 1, HW), jnp.float32),
            jax.ShapeDtypeStruct((N, 1, HW), jnp.float32),
        ),
        grid=(N // Nb,),
        in_specs=[
            pl.BlockSpec((Nb * HW, 9 * ns), lambda i: (i, 0)),
            pl.BlockSpec((HIDDEN + D, KW), lambda i: (0, 0)),
            pl.BlockSpec((HIDDEN + D, 1), lambda i: (0, 0)),
        ],
        out_specs=(
            pl.BlockSpec((Nb, ns, HW), lambda i: (i, 0, 0)),
            pl.BlockSpec((Nb, ns + 1, HW), lambda i: (i, 0, 0)),
            pl.BlockSpec((Nb, 1, HW), lambda i: (i, 0, 0)),
            pl.BlockSpec((Nb, 1, HW), lambda i: (i, 0, 0)),
            pl.BlockSpec((Nb, 1, HW), lambda i: (i, 0, 0)),
        ),
        compiler_params=pltpu.CompilerParams(
            dimension_semantics=("parallel",)),
    )(xk2d, wslab, bslab)


def ca_model_forward(x_nchw, wslab, bslab, steps=1):
    """Matches CAModel.forward; returns (y1, y2, y3, y4, y5) in torch layouts."""
    assert steps >= 1
    N, ns, H, W = x_nchw.shape
    x = x_nchw
    for s in range(steps):
        y1, y2, y3, y4, y5 = _ca_step(x, wslab, bslab)
        if s + 1 < steps:
            # TODO(synk): for steps > 1, keep the CA state resident in VMEM and
            # loop inside the kernel instead of round-tripping through HBM.
            x = jax.nn.softmax(y1, axis=1).reshape(N, ns, H, W)
    # kernel outputs are already channel-major: reshapes only, no transposes.
    return (y1.reshape(N, ns, H, W),
            y2.reshape(N, ns + 1, H, W),
            y3.reshape(N, H * W),
            y4.reshape(N, H * W),
            y5.reshape(N, H * W))


# ----------------------------------------------------------------------------
# Parameter packing: 12 torch-layout tensors -> one weight slab + one bias slab.
# ----------------------------------------------------------------------------
def pack_params(Wc, bc, W1, b1, W2, b2, W3, b3, W4, b4, W5, b5):
    cout, cin, kh, kw = Wc.shape
    assert (cout, kh, kw) == (HIDDEN, 3, 3)
    ns = cin
    D = 2 * ns + 4
    KW = max(9 * ns, HIDDEN)

    wslab = jnp.zeros((HIDDEN + D, KW), jnp.float32)
    # rows [0, 32), lanes [0, 9*Cin): w[co, (ky*3 + kx)*Cin + ci]  (matches im2col order)
    wc = jnp.transpose(Wc, (0, 2, 3, 1)).reshape(HIDDEN, 9 * ns)
    wslab = wslab.at[:HIDDEN, :9 * ns].set(wc)
    wh = jnp.concatenate([W1, W2, W3, W4, W5], axis=0)          # (D, 32)
    wslab = wslab.at[HIDDEN:, :HIDDEN].set(wh)

    bslab = jnp.concatenate([bc, b1, b2, b3, b4, b5])[:, None]  # (32+D, 1)
    return wslab.astype(jnp.float32), bslab.astype(jnp.float32)


# ----------------------------------------------------------------------------
# Pure-JAX reference (numerical ground truth).
# ----------------------------------------------------------------------------
def ref_forward(x_nchw, Wc, bc, W1, b1, W2, b2, W3, b3, W4, b4, W5, b5, steps=1):
    x = x_nchw.astype(jnp.float32)
    N = x.shape[0]
    for s in range(steps):
        h = jax.lax.conv_general_dilated(
            x, Wc, (1, 1), "SAME",
            dimension_numbers=("NCHW", "OIHW", "NCHW"))
        h = jnp.maximum(h + bc[None, :, None, None], 0.0)

        def c1x1(Wk, bk):
            return jnp.einsum("nchw,dc->ndhw", h, Wk) + bk[None, :, None, None]

        def flat_sm(Wk, bk):
            sc = jnp.einsum("nchw,c->nhw", h, Wk[0]) + bk[0]
            return jax.nn.softmax(sc.reshape(N, -1), axis=1)

        y1, y2 = c1x1(W1, b1), c1x1(W2, b2)
        y3, y4, y5 = flat_sm(W3, b3), flat_sm(W4, b4), flat_sm(W5, b5)
        if s + 1 < steps:
            x = jax.nn.softmax(y1, axis=1)
    return y1, y2, y3, y4, y5


if __name__ == "__main__":
    num_states = 4
    N, H, W = 2, 16, 16

    key = jax.random.PRNGKey(0)
    ks = jax.random.split(key, 13)
    x = jax.random.normal(ks[0], (N, num_states, H, W), jnp.float32)

    def uni(k, shape, fan_in):
        bound = 1.0 / float(fan_in) ** 0.5
        return jax.random.uniform(k, shape, jnp.float32, -bound, bound)

    # torch-default-style uniform init, canonical torch layouts
    Wc = uni(ks[1], (HIDDEN, num_states, 3, 3), num_states * 9)
    bc = uni(ks[2], (HIDDEN,), num_states * 9)
    W1 = uni(ks[3], (num_states, HIDDEN), HIDDEN)
    b1 = uni(ks[4], (num_states,), HIDDEN)
    W2 = uni(ks[5], (num_states + 1, HIDDEN), HIDDEN)
    b2 = uni(ks[6], (num_states + 1,), HIDDEN)
    W3 = uni(ks[7], (1, HIDDEN), HIDDEN)
    b3 = uni(ks[8], (1,), HIDDEN)
    W4 = uni(ks[9], (1, HIDDEN), HIDDEN)
    b4 = uni(ks[10], (1,), HIDDEN)
    W5 = uni(ks[11], (1, HIDDEN), HIDDEN)
    b5 = uni(ks[12], (1,), HIDDEN)

    wslab, bslab = pack_params(Wc, bc, W1, b1, W2, b2, W3, b3, W4, b4, W5, b5)

    fwd = jax.jit(functools.partial(ca_model_forward, steps=1))
    outs = jax.block_until_ready(fwd(x, wslab, bslab))

    refs = ref_forward(x, Wc, bc, W1, b1, W2, b2, W3, b3, W4, b4, W5, b5, steps=1)

    names = ("y1", "y2", "y3", "y4", "y5")
    # y3..y5 use the approximate (EUP) reciprocal -> slightly looser tolerance.
    tols = ((2e-4, 2e-4), (2e-4, 2e-4), (1e-3, 1e-3), (1e-3, 1e-3), (1e-3, 1e-3))
    for name, o, r, (atol, rtol) in zip(names, outs, refs, tols):
        assert o.shape == r.shape, (name, o.shape, r.shape)
        assert jnp.allclose(o, r, atol=atol, rtol=rtol), f"mismatch vs reference: {name}"

    print("KERNEL_OK")
</pallas_src>

<mosaic_0001>
module attributes {stable_mosaic.version = 11 : i64} {
  func.func @_ca_kernel(%arg0: i32, %arg1: memref<256x36xf32, #tpu.memory_space<vmem>>, %arg2: memref<44x36xf32, #tpu.memory_space<vmem>>, %arg3: memref<44x1xf32, #tpu.memory_space<vmem>>, %arg4: memref<1x4x256xf32, #tpu.memory_space<vmem>>, %arg5: memref<1x5x256xf32, #tpu.memory_space<vmem>>, %arg6: memref<1x1x256xf32, #tpu.memory_space<vmem>>, %arg7: memref<1x1x256xf32, #tpu.memory_space<vmem>>, %arg8: memref<1x1x256xf32, #tpu.memory_space<vmem>>) attributes {dimension_semantics = [#tpu.dimension_semantics<parallel>], iteration_bounds = array<i64: 2>, scalar_prefetch = 0 : i64, scratch_operands = 0 : i64, tpu.core_type = #tpu.core_type<tc>, window_params = [{transform_indices = @transform_0, window_bounds = array<i64: 256, 36>}, {pipeline_mode = #tpu.pipeline_mode<synchronous>, transform_indices = @transform_1, window_bounds = array<i64: 44, 36>}, {pipeline_mode = #tpu.pipeline_mode<synchronous>, transform_indices = @transform_2, window_bounds = array<i64: 44, 1>}, {transform_indices = @transform_3, window_bounds = array<i64: 1, 4, 256>}, {transform_indices = @transform_4, window_bounds = array<i64: 1, 5, 256>}, {transform_indices = @transform_5, window_bounds = array<i64: 1, 1, 256>}, {transform_indices = @transform_6, window_bounds = array<i64: 1, 1, 256>}, {transform_indices = @transform_7, window_bounds = array<i64: 1, 1, 256>}]} {
    %c0 = arith.constant 0 : index
    %c0_0 = arith.constant 0 : index
    %0 = vector.load %arg1[%c0, %c0_0] : memref<256x36xf32, #tpu.memory_space<vmem>>, vector<256x36xf32>
    %c0_1 = arith.constant 0 : index
    %c0_2 = arith.constant 0 : index
    %1 = vector.load %arg2[%c0_1, %c0_2] : memref<44x36xf32, #tpu.memory_space<vmem>>, vector<32x36xf32>
    %cst = arith.constant dense<0.000000e+00> : vector<32x256xf32>
    %2 = tpu.matmul %1, %0, %cst {dimension_numbers = #tpu.dot_dimension_numbers<[1], [1], [0], [0], [0, 0, 1, 0], [], []>} : vector<32x36xf32>, vector<256x36xf32>, vector<32x256xf32> -> vector<32x256xf32>
    %c0_3 = arith.constant 0 : index
    %c0_4 = arith.constant 0 : index
    %3 = vector.load %arg3[%c0_3, %c0_4] : memref<44x1xf32, #tpu.memory_space<vmem>>, vector<32x1xf32>
    %4 = vector.broadcast %3 : vector<32x1xf32> to vector<32x256xf32>
    %5 = arith.addf %2, %4 : vector<32x256xf32>
    %cst_5 = arith.constant 0.000000e+00 : f32
    %6 = vector.broadcast %cst_5 : f32 to vector<32x256xf32>
    %7 = arith.maximumf %5, %6 : vector<32x256xf32>
    %c32 = arith.constant 32 : index
    %c0_6 = arith.constant 0 : index
    %8 = vector.load %arg2[%c32, %c0_6] : memref<44x36xf32, #tpu.memory_space<vmem>>, vector<12x32xf32>
    %c32_7 = arith.constant 32 : index
    %c0_8 = arith.constant 0 : index
    %9 = vector.load %arg3[%c32_7, %c0_8] : memref<44x1xf32, #tpu.memory_space<vmem>>, vector<12x1xf32>
    %cst_9 = arith.constant dense<0.000000e+00> : vector<12x256xf32>
    %10 = tpu.matmul %8, %7, %cst_9 {dimension_numbers = #tpu.dot_dimension_numbers<[1], [0], [0], [1], [0, 0, 1, 1], [], []>} : vector<12x32xf32>, vector<32x256xf32>, vector<12x256xf32> -> vector<12x256xf32>
    %11 = vector.broadcast %9 : vector<12x1xf32> to vector<12x256xf32>
    %12 = arith.addf %10, %11 : vector<12x256xf32>
    %13 = vector.extract_strided_slice %12 {offsets = [0, 0], sizes = [4, 256], strides = [1, 1]} : vector<12x256xf32> to vector<4x256xf32>
    %c0_10 = arith.constant 0 : index
    %c0_11 = arith.constant 0 : index
    %c0_12 = arith.constant 0 : index
    %14 = vector.load %arg4[%c0_10, %c0_11, %c0_12] : memref<1x4x256xf32, #tpu.memory_space<vmem>>, vector<1x4x256xf32>
    %15 = vector.shape_cast %14 : vector<1x4x256xf32> to vector<4x256xf32>
    %16 = vector.shape_cast %13 : vector<4x256xf32> to vector<1x4x256xf32>
    tpu.vector_store %arg4[%c0_10, %c0_11, %c0_12], %16 {strides = array<i32>} : memref<1x4x256xf32, #tpu.memory_space<vmem>>, vector<1x4x256xf32>,
    %17 = vector.extract_strided_slice %12 {offsets = [4, 0], sizes = [5, 256], strides = [1, 1]} : vector<12x256xf32> to vector<5x256xf32>
    %c0_13 = arith.constant 0 : index
    %c0_14 = arith.constant 0 : index
    %c0_15 = arith.constant 0 : index
    %18 = vector.load %arg5[%c0_13, %c0_14, %c0_15] : memref<1x5x256xf32, #tpu.memory_space<vmem>>, vector<1x5x256xf32>
    %19 = vector.shape_cast %18 : vector<1x5x256xf32> to vector<5x256xf32>
    %20 = vector.shape_cast %17 : vector<5x256xf32> to vector<1x5x256xf32>
    tpu.vector_store %arg5[%c0_13, %c0_14, %c0_15], %20 {strides = array<i32>} : memref<1x5x256xf32, #tpu.memory_space<vmem>>, vector<1x5x256xf32>,
    %21 = vector.extract_strided_slice %12 {offsets = [9, 0], sizes = [3, 256], strides = [1, 1]} : vector<12x256xf32> to vector<3x256xf32>
    %cst_16 = arith.constant dense<0xFF800000> : vector<3xf32>
    %22 = vector.multi_reduction <maximumf>, %21, %cst_16 [1] : vector<3x256xf32> to vector<3xf32>
    %23 = vector.shape_cast %22 : vector<3xf32> to vector<3x1xf32>
    %24 = vector.broadcast %23 : vector<3x1xf32> to vector<3x256xf32>
    %25 = arith.subf %21, %24 : vector<3x256xf32>
    %26 = math.exp %25 : vector<3x256xf32>
    %cst_17 = arith.constant dense<0.000000e+00> : vector<3xf32>
    %27 = vector.multi_reduction <add>, %26, %cst_17 [1] : vector<3x256xf32> to vector<3xf32>
    %28 = vector.shape_cast %27 : vector<3xf32> to vector<3x1xf32>
    %29 = tpu.reciprocal %28 {approx = true} : vector<3x1xf32> -> vector<3x1xf32>
    %30 = vector.broadcast %29 : vector<3x1xf32> to vector<3x256xf32>
    %31 = arith.mulf %26, %30 : vector<3x256xf32>
    %32 = vector.extract_strided_slice %31 {offsets = [0, 0], sizes = [1, 256], strides = [1, 1]} : vector<3x256xf32> to vector<1x256xf32>
    %c0_18 = arith.constant 0 : index
    %c0_19 = arith.constant 0 : index
    %c0_20 = arith.constant 0 : index
    %33 = vector.load %arg6[%c0_18, %c0_19, %c0_20] : memref<1x1x256xf32, #tpu.memory_space<vmem>>, vector<1x1x256xf32>
    %34 = vector.shape_cast %33 : vector<1x1x256xf32> to vector<1x256xf32>
    %35 = vector.shape_cast %32 : vector<1x256xf32> to vector<1x1x256xf32>
    tpu.vector_store %arg6[%c0_18, %c0_19, %c0_20], %35 {strides = array<i32>} : memref<1x1x256xf32, #tpu.memory_space<vmem>>, vector<1x1x256xf32>,
    %36 = vector.extract_strided_slice %31 {offsets = [1, 0], sizes = [1, 256], strides = [1, 1]} : vector<3x256xf32> to vector<1x256xf32>
    %c0_21 = arith.constant 0 : index
    %c0_22 = arith.constant 0 : index
    %c0_23 = arith.constant 0 : index
    %37 = vector.load %arg7[%c0_21, %c0_22, %c0_23] : memref<1x1x256xf32, #tpu.memory_space<vmem>>, vector<1x1x256xf32>
    %38 = vector.shape_cast %37 : vector<1x1x256xf32> to vector<1x256xf32>
    %39 = vector.shape_cast %36 : vector<1x256xf32> to vector<1x1x256xf32>
    tpu.vector_store %arg7[%c0_21, %c0_22, %c0_23], %39 {strides = array<i32>} : memref<1x1x256xf32, #tpu.memory_space<vmem>>, vector<1x1x256xf32>,
    %40 = vector.extract_strided_slice %31 {offsets = [2, 0], sizes = [1, 256], strides = [1, 1]} : vector<3x256xf32> to vector<1x256xf32>
    %c0_24 = arith.constant 0 : index
    %c0_25 = arith.constant 0 : index
    %c0_26 = arith.constant 0 : index
    %41 = vector.load %arg8[%c0_24, %c0_25, %c0_26] : memref<1x1x256xf32, #tpu.memory_space<vmem>>, vector<1x1x256xf32>
    %42 = vector.shape_cast %41 : vector<1x1x256xf32> to vector<1x256xf32>
    %43 = vector.shape_cast %40 : vector<1x256xf32> to vector<1x1x256xf32>
    tpu.vector_store %arg8[%c0_24, %c0_25, %c0_26], %43 {strides = array<i32>} : memref<1x1x256xf32, #tpu.memory_space<vmem>>, vector<1x1x256xf32>,
    return
  }
  func.func @transform_0(%arg0: i32) -> (i32, i32) {
    %c0_i32 = arith.constant 0 : i32
    %c0_i32_0 = arith.constant 0 : i32
    return %arg0, %c0_i32 : i32, i32
  }
  func.func @transform_1(%arg0: i32) -> (i32, i32) {
    %c0_i32 = arith.constant 0 : i32
    %c0_i32_0 = arith.constant 0 : i32
    %c0_i32_1 = arith.constant 0 : i32
    return %c0_i32, %c0_i32_0 : i32, i32
  }
  func.func @transform_2(%arg0: i32) -> (i32, i32) {
    %c0_i32 = arith.constant 0 : i32
    %c0_i32_0 = arith.constant 0 : i32
    %c0_i32_1 = arith.constant 0 : i32
    return %c0_i32, %c0_i32_0 : i32, i32
  }
  func.func @transform_3(%arg0: i32) -> (i32, i32, i32) {
    %c0_i32 = arith.constant 0 : i32
    %c0_i32_0 = arith.constant 0 : i32
    %c0_i32_1 = arith.constant 0 : i32
    return %arg0, %c0_i32, %c0_i32_0 : i32, i32, i32
  }
  func.func @transform_4(%arg0: i32) -> (i32, i32, i32) {
    %c0_i32 = arith.constant 0 : i32
    %c0_i32_0 = arith.constant 0 : i32
    %c0_i32_1 = arith.constant 0 : i32
    return %arg0, %c0_i32, %c0_i32_0 : i32, i32, i32
  }
  func.func @transform_5(%arg0: i32) -> (i32, i32, i32) {
    %c0_i32 = arith.constant 0 : i32
    %c0_i32_0 = arith.constant 0 : i32
    %c0_i32_1 = arith.constant 0 : i32
    return %arg0, %c0_i32, %c0_i32_0 : i32, i32, i32
  }
  func.func @transform_6(%arg0: i32) -> (i32, i32, i32) {
    %c0_i32 = arith.constant 0 : i32
    %c0_i32_0 = arith.constant 0 : i32
    %c0_i32_1 = arith.constant 0 : i32
    return %arg0, %c0_i32, %c0_i32_0 : i32, i32, i32
  }
  func.func @transform_7(%arg0: i32) -> (i32, i32, i32) {
    %c0_i32 = arith.constant 0 : i32
    %c0_i32_0 = arith.constant 0 : i32
    %c0_i32_1 = arith.constant 0 : i32
    return %arg0, %c0_i32, %c0_i32_0 : i32, i32, i32
  }
}

</mosaic_0001>

<llo_original>
// kernel: ca_model_forward.1
$region0: #{ca_model_forward.1}
  #allocation0 [shape = 'u32[]', space=smem, size = 0x4, offset = 0x4, fixed_abs, tag = 'smem constant byte address 0x4 - core index']
  #allocation1 [shape = 'u32[72,128]{1,0:T(1,128)}', space=vmem, size = 0x9000, scoped, tag = 'internal scratch']
  %s0 = inlined_call_operand.vmem [shape: f32[512,36], index: 0, kind: input, shape index: {}]
  %s1 = inlined_call_operand.vmem [shape: f32[44,36], index: 1, kind: input, shape index: {}]
  %s2 = inlined_call_operand.vmem [shape: f32[44,1], index: 2, kind: input, shape index: {}]
  %s3 = inlined_call_operand.vmem [shape: f32[2,4,256], index: 3, kind: output, shape index: {0}]
  %s4 = inlined_call_operand.vmem [shape: f32[2,5,256], index: 4, kind: output, shape index: {1}]
  %s5 = inlined_call_operand.vmem [shape: f32[2,1,256], index: 5, kind: output, shape index: {2}]
  %s6 = inlined_call_operand.vmem [shape: f32[2,1,256], index: 6, kind: output, shape index: {3}]
  %s7 = inlined_call_operand.vmem [shape: f32[2,1,256], index: 7, kind: output, shape index: {4}]
  %8 = xla_tuple %s3, %s4, %s5, %s6, %s7
  %s9 = sld [smem:[#allocation0]]
  $region77: #{ca_model_forward.1} parent=0
    _
  %s11 = ssub.s32 1, %s9
  %s12 = scalar_select 0, %s11, %s9
  loop: start=0, step=1, limit=4
  $region2: #{ca_model_forward.1} parent=0 // loop_pre_header
    _
  $region3: #{ca_model_forward.1} parent=0 // loop_header
    %s14 = sphi 0, %s18
    %p15 = scmp.ge.s32.totalorder %s14, 4
    %s24 = sphi 0, %s26
    %s27 = sphi 0, %s24
    %s28 = sphi 0, %s27
    %s44 = sphi 0, %s28
    %s48 = sphi 0, %s48
    %s50 = sphi 0, %s48
    %s51 = sphi 0, %s50
    %s65 = sphi 0, %s51
    %s69 = sphi 0, %s69
    %s71 = sphi 0, %s69
    %s72 = sphi 0, %s71
    %s86 = sphi 0, %s72
    %s92 = sphi 0, %s94
    %s95 = sphi 0, %s92
    %s96 = sphi 0, %s95
    %s112 = sphi 0, %s96
    %s118 = sphi 0, %s120
    %s121 = sphi 0, %s118
    %s122 = sphi 0, %s121
    %s138 = sphi 0, %s122
    %s144 = sphi 0, %s146
    %s147 = sphi 0, %s144
    %s148 = sphi 0, %s147
    %s164 = sphi 0, %s148
    %s170 = sphi 0, %s172
    %s173 = sphi 0, %s170
    %s174 = sphi 0, %s173
    %s190 = sphi 0, %s174
    %s196 = sphi 0, %s198
    %s199 = sphi 0, %s196
    %s200 = sphi 0, %s199
    %s216 = sphi 0, %s200
  $region4: #{ca_model_forward.1} parent=0 // loop_header_branch
    %17 = sbr.rel (%p15) target = $region8
  $region5: #{ca_model_forward.1} parent=0 // loop_body
    %s19 = ssub.s32 %s14, 1
    %s20 = ssub.s32 %s14, 2
    %s21 = sadd.s32 %s14, 1
    %s22 = ssub.s32 %s14, %s21
    %p23 = scmp.eq.s32.totalorder %s22, 0
    %s25 = sadd.s32 %s24, 1
    %s26 = scalar_select %p23, %s24, %s25
    %p29 = pneg %p23
    %p30 = scmp.eq.s32.totalorder %s14, 1
    %p31 = por %p29, %p30
    %p32 = scmp.ne.s32.totalorder %s24, %s27
    %p33 = scmp.eq.s32.totalorder %s14, 0
    %p34 = por %p32, %p33
    %p35 = scmp.ne.s32.totalorder %s24, %s27
    %p36 = scmp.eq.s32.totalorder %s19, 1
    %p37 = por %p35, %p36
    %p38 = scmp.ne.s32.totalorder %s27, %s28
    %p39 = scmp.eq.s32.totalorder %s19, 0
    %p40 = por %p38, %p39
    %p41 = scmp.ne.s32.totalorder %s27, %s28
    %p42 = scmp.eq.s32.totalorder %s20, 1
    %p43 = por %p41, %p42
    %p45 = scmp.ne.s32.totalorder %s28, %s44
    %p46 = scmp.eq.s32.totalorder %s20, 0
    %p47 = por %p45, %p46
    %s49 = sadd.s32 %s48, 1
    %p52 = scmp.eq.s32.totalorder %s14, 1
    %p53 = scmp.ne.s32.totalorder %s48, %s50
    %p54 = scmp.eq.s32.totalorder %s14, 0
    %p55 = por %p53, %p54
    %p56 = scmp.ne.s32.totalorder %s48, %s50
    %p57 = scmp.eq.s32.totalorder %s19, 1
    %p58 = por %p56, %p57
    %p59 = scmp.ne.s32.totalorder %s50, %s51
    %p60 = scmp.eq.s32.totalorder %s19, 0
    %p61 = por %p59, %p60
    %p62 = scmp.ne.s32.totalorder %s50, %s51
    %p63 = scmp.eq.s32.totalorder %s20, 1
    %p64 = por %p62, %p63
    %p66 = scmp.ne.s32.totalorder %s51, %s65
    %p67 = scmp.eq.s32.totalorder %s20, 0
    %p68 = por %p66, %p67
    %s70 = sadd.s32 %s69, 1
    %p73 = scmp.eq.s32.totalorder %s14, 1
    %p74 = scmp.ne.s32.totalorder %s69, %s71
    %p75 = scmp.eq.s32.totalorder %s14, 0
    %p76 = por %p74, %p75
    %p77 = scmp.ne.s32.totalorder %s69, %s71
    %p78 = scmp.eq.s32.totalorder %s19, 1
    %p79 = por %p77, %p78
    %p80 = scmp.ne.s32.totalorder %s71, %s72
    %p81 = scmp.eq.s32.totalorder %s19, 0
    %p82 = por %p80, %p81
    %p83 = scmp.ne.s32.totalorder %s71, %s72
    %p84 = scmp.eq.s32.totalorder %s20, 1
    %p85 = por %p83, %p84
    %p87 = scmp.ne.s32.totalorder %s72, %s86
    %p88 = scmp.eq.s32.totalorder %s20, 0
    %p89 = por %p87, %p88
    %s90 = ssub.s32 %s14, %s21
    %p91 = scmp.eq.s32.totalorder %s90, 0
    %s93 = sadd.s32 %s92, 1
    %s94 = scalar_select %p91, %s92, %s93
    %p97 = pneg %p91
    %p98 = scmp.eq.s32.totalorder %s14, 1
    %p99 = por %p97, %p98
    %p100 = scmp.ne.s32.totalorder %s92, %s95
    %p101 = scmp.eq.s32.totalorder %s14, 0
    %p102 = por %p100, %p101
    %p103 = scmp.ne.s32.totalorder %s92, %s95
    %p104 = scmp.eq.s32.totalorder %s19, 1
    %p105 = por %p103, %p104
    %p106 = scmp.ne.s32.totalorder %s95, %s96
    %p107 = scmp.eq.s32.totalorder %s19, 0
    %p108 = por %p106, %p107
    %p109 = scmp.ne.s32.totalorder %s95, %s96
    %p110 = scmp.eq.s32.totalorder %s20, 1
    %p111 = por %p109, %p110
    %p113 = scmp.ne.s32.totalorder %s96, %s112
    %p114 = scmp.eq.s32.totalorder %s20, 0
    %p115 = por %p113, %p114
    %s116 = ssub.s32 %s14, %s21
    %p117 = scmp.eq.s32.totalorder %s116, 0
    %s119 = sadd.s32 %s118, 1
    %s120 = scalar_select %p117, %s118, %s119
    %p123 = pneg %p117
    %p124 = scmp.eq.s32.totalorder %s14, 1
    %p125 = por %p123, %p124
    %p126 = scmp.ne.s32.totalorder %s118, %s121
    %p127 = scmp.eq.s32.totalorder %s14, 0
    %p128 = por %p126, %p127
    %p129 = scmp.ne.s32.totalorder %s118, %s121
    %p130 = scmp.eq.s32.totalorder %s19, 1
    %p131 = por %p129, %p130
    %p132 = scmp.ne.s32.totalorder %s121, %s122
    %p133 = scmp.eq.s32.totalorder %s19, 0
    %p134 = por %p132, %p133
    %p135 = scmp.ne.s32.totalorder %s121, %s122
    %p136 = scmp.eq.s32.totalorder %s20, 1
    %p137 = por %p135, %p136
    %p139 = scmp.ne.s32.totalorder %s122, %s138
    %p140 = scmp.eq.s32.totalorder %s20, 0
    %p141 = por %p139, %p140
    %s142 = ssub.s32 %s14, %s21
    %p143 = scmp.eq.s32.totalorder %s142, 0
    %s145 = sadd.s32 %s144, 1
    %s146 = scalar_select %p143, %s144, %s145
    %p149 = pneg %p143
    %p150 = scmp.eq.s32.totalorder %s14, 1
    %p151 = por %p149, %p150
    %p152 = scmp.ne.s32.totalorder %s144, %s147
    %p153 = scmp.eq.s32.totalorder %s14, 0
    %p154 = por %p152, %p153
    %p155 = scmp.ne.s32.totalorder %s144, %s147
    %p156 = scmp.eq.s32.totalorder %s19, 1
    %p157 = por %p155, %p156
    %p158 = scmp.ne.s32.totalorder %s147, %s148
    %p159 = scmp.eq.s32.totalorder %s19, 0
    %p160 = por %p158, %p159
    %p161 = scmp.ne.s32.totalorder %s147, %s148
    %p162 = scmp.eq.s32.totalorder %s20, 1
    %p163 = por %p161, %p162
    %p165 = scmp.ne.s32.totalorder %s148, %s164
    %p166 = scmp.eq.s32.totalorder %s20, 0
    %p167 = por %p165, %p166
    %s168 = ssub.s32 %s14, %s21
    %p169 = scmp.eq.s32.totalorder %s168, 0
    %s171 = sadd.s32 %s170, 1
    %s172 = scalar_select %p169, %s170, %s171
    %p175 = pneg %p169
    %p176 = scmp.eq.s32.totalorder %s14, 1
    %p177 = por %p175, %p176
    %p178 = scmp.ne.s32.totalorder %s170, %s173
    %p179 = scmp.eq.s32.totalorder %s14, 0
    %p180 = por %p178, %p179
    %p181 = scmp.ne.s32.totalorder %s170, %s173
    %p182 = scmp.eq.s32.totalorder %s19, 1
    %p183 = por %p181, %p182
    %p184 = scmp.ne.s32.totalorder %s173, %s174
    %p185 = scmp.eq.s32.totalorder %s19, 0
    %p186 = por %p184, %p185
    %p187 = scmp.ne.s32.totalorder %s173, %s174
    %p188 = scmp.eq.s32.totalorder %s20, 1
    %p189 = por %p187, %p188
    %p191 = scmp.ne.s32.totalorder %s174, %s190
    %p192 = scmp.eq.s32.totalorder %s20, 0
    %p193 = por %p191, %p192
    %s194 = ssub.s32 %s14, %s21
    %p195 = scmp.eq.s32.totalorder %s194, 0
    %s197 = sadd.s32 %s196, 1
    %s198 = scalar_select %p195, %s196, %s197
    %p201 = pneg %p195
    %p202 = scmp.eq.s32.totalorder %s14, 1
    %p203 = por %p201, %p202
    %p204 = scmp.ne.s32.totalorder %s196, %s199
    %p205 = scmp.eq.s32.totalorder %s14, 0
    %p206 = por %p204, %p205
    %p207 = scmp.ne.s32.totalorder %s196, %s199
    %p208 = scmp.eq.s32.totalorder %s19, 1
    %p209 = por %p207, %p208
    %p210 = scmp.ne.s32.totalorder %s199, %s200
    %p211 = scmp.eq.s32.totalorder %s19, 0
    %p212 = por %p210, %p211
    %p213 = scmp.ne.s32.totalorder %s199, %s200
    %p214 = scmp.eq.s32.totalorder %s20, 1
    %p215 = por %p213, %p214
    %p217 = scmp.ne.s32.totalorder %s200, %s216
    %p218 = scmp.eq.s32.totalorder %s20, 0
    %p219 = por %p217, %p218
    %p220 = scmp.le.s32.totalorder 1, %s14
    %p221 = scmp.lt.s32.totalorder %s14, 3
    %p222 = pnand %p220, %p221
    %p223 = pneg %p222
    // Predicated region
    $region9: #{ca_model_forward.1} parent=5 // pred_check
      _
    $region10: #{ca_model_forward.1} parent=5 // pred_check_branch
      %225 = sbr.rel (%p222) target = $region12
    $region11: #{ca_model_forward.1} parent=5 // pred_region
      %s226 = ssub.s32 %s14, 1
      // Predicated region
      $region13: #{ca_model_forward.1} parent=11 // pred_check
        %p227 = pneg %p61
      $region14: #{ca_model_forward.1} parent=11 // pred_check_branch
        %229 = sbr.rel (%p227) target = $region16
      $region15: #{ca_model_forward.1} parent=11 // pred_region
        _
      $region16: #{ca_model_forward.1} parent=11 // pred_fallthru
        _
      // Predicated region
      $region17: #{ca_model_forward.1} parent=11 // pred_check
        %p230 = pneg %p82
      $region18: #{ca_model_forward.1} parent=11 // pred_check_branch
        %232 = sbr.rel (%p230) target = $region20
      $region19: #{ca_model_forward.1} parent=11 // pred_region
        _
      $region20: #{ca_model_forward.1} parent=11 // pred_fallthru
        _
    $region12: #{ca_model_forward.1} parent=5 // pred_fallthru
      _
    %p233 = scmp.lt.s32.totalorder %s14, 2
    // Predicated region
    $region21: #{ca_model_forward.1} parent=5 // pred_check
      %p234 = pneg %p233
    $region22: #{ca_model_forward.1} parent=5 // pred_check_branch
      %236 = sbr.rel (%p234) target = $region24
    $region23: #{ca_model_forward.1} parent=5 // pred_region
      // Predicated region
      $region25: #{ca_model_forward.1} parent=23 // pred_check
        %p237 = pneg %p34
      $region26: #{ca_model_forward.1} parent=23 // pred_check_branch
        %239 = sbr.rel (%p237) target = $region28
      $region27: #{ca_model_forward.1} parent=23 // pred_region
        %s240 = smul.u32 32, %s14
        %p241 = scmp.lt.s32.totalorder %s240, 63
        %s242 = scalar_select %p241, %s240, 63
        %s243 = smul.addr %s242, 8
        %s244 = scalar_lea.vmem %s0, %s243
        %s245 = smul.u32 32, %s14
      $region28: #{ca_model_forward.1} parent=23 // pred_fallthru
        _
    $region24: #{ca_model_forward.1} parent=5 // pred_fallthru
      _
    %p246 = scmp.le.s32.totalorder 1, %s14
    %p247 = scmp.lt.s32.totalorder %s14, 3
    %p248 = pnand %p246, %p247
    %p249 = pneg %p248
    // Predicated region
    $region29: #{ca_model_forward.1} parent=5 // pred_check
      _
    $region30: #{ca_model_forward.1} parent=5 // pred_check_branch
      %251 = sbr.rel (%p248) target = $region32
    $region31: #{ca_model_forward.1} parent=5 // pred_region
      %s252 = ssub.s32 %s14, 1
      %s253 = smul.u32 32, %s19
      %p254 = scmp.lt.s32.totalorder %s253, 63
      %s255 = scalar_select %p254, %s253, 63
      %s256 = smul.addr %s255, 8
      %s257 = scalar_lea.vmem %s0, %s256
      %p258 = pneg %p40
      %p259 = pneg %p37
      %p260 = pneg %p61
      %p261 = pneg %p58
      %p262 = pneg %p82
      %p263 = pneg %p79
      %p264 = pneg %p108
      %p265 = pneg %p105
      %p266 = scmp.lt.s32.totalorder %s19, 1
      %s267 = scalar_select %p266, %s19, 1
      %s268 = smul.addr %s267, 2
      %s269 = smul.addr %s268, 4
      %s270 = scalar_lea.vmem %s3, %s269
      %p271 = pneg %p134
      %p272 = pneg %p131
      %p273 = scmp.lt.s32.totalorder %s19, 1
      %s274 = scalar_select %p273, %s19, 1
      %s275 = smul.addr %s274, 2
      %s276 = smul.addr %s275, 8
      %s277 = scalar_lea.vmem %s4, %s276
      %p278 = pneg %p160
      %p279 = pneg %p157
      %p280 = scmp.lt.s32.totalorder %s19, 1
      %s281 = scalar_select %p280, %s19, 1
      %s282 = smul.addr %s281, 2
      %s283 = scalar_lea.vmem %s5, %s282
      %p284 = pneg %p186
      %p285 = pneg %p183
      %p286 = scmp.lt.s32.totalorder %s19, 1
      %s287 = scalar_select %p286, %s19, 1
      %s288 = smul.addr %s287, 2
      %s289 = scalar_lea.vmem %s6, %s288
      %p290 = pneg %p212
      %p291 = pneg %p209
      %p292 = scmp.lt.s32.totalorder %s19, 1
      %s293 = scalar_select %p292, %s19, 1
      %s294 = smul.addr %s293, 2
      %s295 = scalar_lea.vmem %s7, %s294
      %s296 = smul.u32 32, %s19
      %p297 = scmp.lt.s32.totalorder %s296, 63
      %s298 = scalar_select %p297, %s296, 63
      %s299 = smul.addr %s298, 8
      %s300 = scalar_lea.vmem %s0, %s299
      %s301 = smul.u32 32, %s19
      %p302 = scmp.lt.s32.totalorder %s19, 1
      %s303 = scalar_select %p302, %s19, 1
      %s304 = smul.addr %s303, 2
      %s305 = smul.addr %s304, 4
      %s306 = scalar_lea.vmem %s3, %s305
      %p307 = scmp.lt.s32.totalorder %s19, 1
      %s308 = scalar_select %p307, %s19, 1
      %s309 = smul.addr %s308, 2
      %s310 = smul.addr %s309, 8
      %s311 = scalar_lea.vmem %s4, %s310
      %p312 = scmp.lt.s32.totalorder %s19, 1
      %s313 = scalar_select %p312, %s19, 1
      %s314 = smul.addr %s313, 2
      %s315 = scalar_lea.vmem %s5, %s314
      %p316 = scmp.lt.s32.totalorder %s19, 1
      %s317 = scalar_select %p316, %s19, 1
      %s318 = smul.addr %s317, 2
      %s319 = scalar_lea.vmem %s6, %s318
      %p320 = scmp.lt.s32.totalorder %s19, 1
      %s321 = scalar_select %p320, %s19, 1
      %s322 = smul.addr %s321, 2
      %s323 = scalar_lea.vmem %s7, %s322
      %v324 = vld [vmem:[%s300] sm:$0xff]
      %v325 = vld [vmem:[%s300 + $0x8] sm:$0xff]
      %v326 = vld [vmem:[%s300 + $0x10] sm:$0xff]
      %v327 = vld [vmem:[%s300 + $0x18] sm:$0xff]
      %v328 = vld [vmem:[%s300 + $0x20] sm:$0xff]
      %v329 = vld [vmem:[%s300 + $0x28] sm:$0xff]
      %v330 = vld [vmem:[%s300 + $0x30] sm:$0xff]
      %v331 = vld [vmem:[%s300 + $0x38] sm:$0xff]
      %v332 = vld [vmem:[%s300 + $0x40] sm:$0xff]
      %v333 = vld [vmem:[%s300 + $0x48] sm:$0xff]
      %v334 = vld [vmem:[%s300 + $0x50] sm:$0xff]
      %v335 = vld [vmem:[%s300 + $0x58] sm:$0xff]
      %v336 = vld [vmem:[%s300 + $0x60] sm:$0xff]
      %v337 = vld [vmem:[%s300 + $0x68] sm:$0xff]
      %v338 = vld [vmem:[%s300 + $0x70] sm:$0xff]
      %v339 = vld [vmem:[%s300 + $0x78] sm:$0xff]
      %v340 = vld [vmem:[%s300 + $0x80] sm:$0xff]
      %v341 = vld [vmem:[%s300 + $0x88] sm:$0xff]
      %v342 = vld [vmem:[%s300 + $0x90] sm:$0xff]
      %v343 = vld [vmem:[%s300 + $0x98] sm:$0xff]
      %v344 = vld [vmem:[%s300 + $0xa0] sm:$0xff]
      %v345 = vld [vmem:[%s300 + $0xa8] sm:$0xff]
      %v346 = vld [vmem:[%s300 + $0xb0] sm:$0xff]
      %v347 = vld [vmem:[%s300 + $0xb8] sm:$0xff]
      %v348 = vld [vmem:[%s300 + $0xc0] sm:$0xff]
      %v349 = vld [vmem:[%s300 + $0xc8] sm:$0xff]
      %v350 = vld [vmem:[%s300 + $0xd0] sm:$0xff]
      %v351 = vld [vmem:[%s300 + $0xd8] sm:$0xff]
      %v352 = vld [vmem:[%s300 + $0xe0] sm:$0xff]
      %v353 = vld [vmem:[%s300 + $0xe8] sm:$0xff]
      %v354 = vld [vmem:[%s300 + $0xf0] sm:$0xff]
      %v355 = vld [vmem:[%s300 + $0xf8] sm:$0xff]
      %v356 = vld [vmem:[%s1] sm:$0xff]
      %v357 = vld [vmem:[%s1 + $0x8] sm:$0xff]
      %v358 = vld [vmem:[%s1 + $0x10] sm:$0xff]
      %v359 = vld [vmem:[%s1 + $0x18] sm:$0xff]
      %v360 = vld [vmem:[%s2] sm:$0xff]
      %v361 = vld [vmem:[%s2 + $0x8] sm:$0xff]
      %v362 = vld [vmem:[%s2 + $0x10] sm:$0xff]
      %v363 = vld [vmem:[%s2 + $0x18] sm:$0xff]
      %365 = vset.pattern.permute.xlu0 0
      %366 = vperm.xlu0 %365, %v360
      %v367 = vpop.permute.xlu0 %366
      %370 = vset.pattern.permute.xlu0 0
      %371 = vperm.xlu0 %370, %v361
      %v372 = vpop.permute.xlu0 %371
      %375 = vset.pattern.permute.xlu0 0
      %376 = vperm.xlu0 %375, %v362
      %v377 = vpop.permute.xlu0 %376
      %380 = vset.pattern.permute.xlu0 0
      %381 = vperm.xlu0 %380, %v363
      %v382 = vpop.permute.xlu0 %381
      %vm384 = vcmask 293888
      %v386 = vsel %vm384, %v356, 0
      %v389 = vsel %vm384, %v357, 0
      %v392 = vsel %vm384, %v358, 0
      %v395 = vsel %vm384, %v359, 0
      %v398 = vsel %vm384, %v324, 0
      %v401 = vsel %vm384, %v325, 0
      %v404 = vsel %vm384, %v326, 0
      %v407 = vsel %vm384, %v327, 0
      %v410 = vsel %vm384, %v328, 0
      %v413 = vsel %vm384, %v329, 0
      %v416 = vsel %vm384, %v330, 0
      %v419 = vsel %vm384, %v331, 0
      %v422 = vsel %vm384, %v332, 0
      %v425 = vsel %vm384, %v333, 0
      %v428 = vsel %vm384, %v334, 0
      %v431 = vsel %vm384, %v335, 0
      %v434 = vsel %vm384, %v336, 0
      %v437 = vsel %vm384, %v337, 0
      %v440 = vsel %vm384, %v338, 0
      %v443 = vsel %vm384, %v339, 0
      %v446 = vsel %vm384, %v340, 0
      %v449 = vsel %vm384, %v341, 0
      %v452 = vsel %vm384, %v342, 0
      %v455 = vsel %vm384, %v343, 0
      %v458 = vsel %vm384, %v344, 0
      %v461 = vsel %vm384, %v345, 0
      %v464 = vsel %vm384, %v346, 0
      %v467 = vsel %vm384, %v347, 0
      %v470 = vsel %vm384, %v348, 0
      %v473 = vsel %vm384, %v349, 0
      %v476 = vsel %vm384, %v350, 0
      %v479 = vsel %vm384, %v351, 0
      %v482 = vsel %vm384, %v352, 0
      %v485 = vsel %vm384, %v353, 0
      %v488 = vsel %vm384, %v354, 0
      %v491 = vsel %vm384, %v355, 0
      %493 = vmatpush.xpose.msra.mxu0 %v443
      %494 = vmatpush.xpose.msra.mxu0 %v440
      %495 = vmatpush.xpose.msra.mxu0 %v437
      %496 = vmatpush.xpose.msra.mxu0 %v434
      %497 = vmatpush.xpose.msra.mxu0 %v431
      %498 = vmatpush.xpose.msra.mxu0 %v428
      %499 = vmatpush.xpose.msra.mxu0 %v425
      %500 = vmatpush.xpose.msra.mxu0 %v422
      %501 = vmatpush.xpose.msra.mxu0 %v419
      %502 = vmatpush.xpose.msra.mxu0 %v416
      %503 = vmatpush.xpose.msra.mxu0 %v413
      %504 = vmatpush.xpose.msra.mxu0 %v410
      %505 = vmatpush.xpose.msra.mxu0 %v407
      %506 = vmatpush.xpose.msra.mxu0 %v404
      %507 = vmatpush.xpose.msra.mxu0 %v401
      %508 = vmatpush.xpose.msra.mxu0 %v398
      %509 = vmatmul.f32.gmra.mxu0 %v386
      %v510 = vpop.f32.mrf.mxu0
      %v511 = vadd.f32 %v367, %v510
      %512 = vmatmul.f32.gmra.mxu0 %v389
      %v513 = vpop.f32.mrf.mxu0
      %v514 = vadd.f32 %v372, %v513
      %515 = vmatmul.f32.gmra.mxu0 %v392
      %v516 = vpop.f32.mrf.mxu0
      %v517 = vadd.f32 %v377, %v516
      %518 = vmatmul.f32.gmra.mxu0 %v395
      %v519 = vpop.f32.mrf.mxu0
      %v520 = vadd.f32 %v382, %v519
      %521 = vdwg.mxu0
      %522 = vmatpush.xpose.msra.mxu0 %v491
      %523 = vmatpush.xpose.msra.mxu0 %v488
      %524 = vmatpush.xpose.msra.mxu0 %v485
      %525 = vmatpush.xpose.msra.mxu0 %v482
      %526 = vmatpush.xpose.msra.mxu0 %v479
      %527 = vmatpush.xpose.msra.mxu0 %v476
      %528 = vmatpush.xpose.msra.mxu0 %v473
      %529 = vmatpush.xpose.msra.mxu0 %v470
      %530 = vmatpush.xpose.msra.mxu0 %v467
      %531 = vmatpush.xpose.msra.mxu0 %v464
      %532 = vmatpush.xpose.msra.mxu0 %v461
      %533 = vmatpush.xpose.msra.mxu0 %v458
      %534 = vmatpush.xpose.msra.mxu0 %v455
      %535 = vmatpush.xpose.msra.mxu0 %v452
      %536 = vmatpush.xpose.msra.mxu0 %v449
      %537 = vmatpush.xpose.msra.mxu0 %v446
      %538 = vmatmul.f32.gmra.mxu0 %v386
      %v539 = vpop.f32.mrf.mxu0
      %v540 = vadd.f32 %v367, %v539
      %541 = vmatmul.f32.gmra.mxu0 %v389
      %v542 = vpop.f32.mrf.mxu0
      %v543 = vadd.f32 %v372, %v542
      %544 = vmatmul.f32.gmra.mxu0 %v392
      %v545 = vpop.f32.mrf.mxu0
      %v546 = vadd.f32 %v377, %v545
      %547 = vmatmul.f32.gmra.mxu0 %v395
      %v548 = vpop.f32.mrf.mxu0
      %v549 = vadd.f32 %v382, %v548
      %550 = vdwg.mxu0
      %v551 = vmax.f32 %v511, 0.0
      %v552 = vmax.f32 %v540, 0.0
      %v553 = vmax.f32 %v514, 0.0
      %v554 = vmax.f32 %v543, 0.0
      %v555 = vmax.f32 %v517, 0.0
      %v556 = vmax.f32 %v546, 0.0
      %v557 = vmax.f32 %v520, 0.0
      %v558 = vmax.f32 %v549, 0.0
      %v559 = vld [vmem:[%s1 + $0x20] sm:$0xff]
      %v560 = vld [vmem:[%s1 + $0x28] sm:$0xf]
      %v561 = vld [vmem:[%s2 + $0x20] sm:$0xff]
      %v562 = vld [vmem:[%s2 + $0x28] sm:$0xf]
      %564 = vset.pattern.permute.xlu0 0
      %565 = vperm.xlu0 %564, %v561
      %v566 = vpop.permute.xlu0 %565
      %569 = vset.pattern.permute.xlu0 0
      %570 = vperm.xlu0 %569, %v562
      %v571 = vpop.permute.xlu0 %570
      %vm573 = vcmask 261120
      %v575 = vsel %vm573, %v559, 0
      %v578 = vsel %vm573, %v560, 0
      %580 = vmatpush.msra.mxu0 0.0
      %581 = vmatpush.msra.mxu0 0.0
      %582 = vmatpush.msra.mxu0 0.0
      %583 = vmatpush.msra.mxu0 0.0
      %584 = vmatpush.msra.mxu0 0.0
      %585 = vmatpush.msra.mxu0 0.0
      %586 = vmatpush.msra.mxu0 0.0
      %587 = vmatpush.msra.mxu0 0.0
      %588 = vmatpush.msra.mxu0 0.0
      %589 = vmatpush.msra.mxu0 0.0
      %590 = vmatpush.msra.mxu0 0.0
      %591 = vmatpush.msra.mxu0 0.0
      %592 = vmatpush.msra.mxu0 %v557
      %593 = vmatpush.msra.mxu0 %v555
      %594 = vmatpush.msra.mxu0 %v553
      %595 = vmatpush.msra.mxu0 %v551
      %596 = vmatmul.f32.gmra.mxu0 %v575
      %v597 = vpop.f32.mrf.mxu0
      %v598 = vadd.f32 %v566, %v597
      %599 = vmatmul.f32.gmra.mxu0 %v578
      %v600 = vpop.f32.mrf.mxu0
      %v601 = vadd.f32 %v571, %v600
      %602 = vdwg.mxu0
      %603 = vmatpush.msra.mxu0 0.0
      %604 = vmatpush.msra.mxu0 0.0
      %605 = vmatpush.msra.mxu0 0.0
      %606 = vmatpush.msra.mxu0 0.0
      %607 = vmatpush.msra.mxu0 0.0
      %608 = vmatpush.msra.mxu0 0.0
      %609 = vmatpush.msra.mxu0 0.0
      %610 = vmatpush.msra.mxu0 0.0
      %611 = vmatpush.msra.mxu0 0.0
      %612 = vmatpush.msra.mxu0 0.0
      %613 = vmatpush.msra.mxu0 0.0
      %614 = vmatpush.msra.mxu0 0.0
      %615 = vmatpush.msra.mxu0 %v558
      %616 = vmatpush.msra.mxu0 %v556
      %617 = vmatpush.msra.mxu0 %v554
      %618 = vmatpush.msra.mxu0 %v552
      %619 = vmatmul.f32.gmra.mxu0 %v575
      %v620 = vpop.f32.mrf.mxu0
      %v621 = vadd.f32 %v566, %v620
      %622 = vmatmul.f32.gmra.mxu0 %v578
      %v623 = vpop.f32.mrf.mxu0
      %v624 = vadd.f32 %v571, %v623
      %625 = vdwg.mxu0
      %v628 = vrot.slane %v621, 4
      %vm629 = vcmask 1043456
      %v630 = vsel %vm629, %v598, %v628
      %632 = vst [vmem:[%s306] sm:$0xff] %v630
      %v635 = vrot.slane %v598, 4
      %v636 = vrot.slane %v601, 4
      %v637 = vsel %vm629, %v635, %v636
      %v638 = vrot.slane %v624, 4
      %v639 = vsel %vm629, %v628, %v638
      %642 = vst [vmem:[%s311] sm:$0x1f] %v637
      %643 = vst [vmem:[%s311 + $0x8] sm:$0x1f] %v639
      %vm644 = vcmask 1043457
      %v645 = vsel %vm644, %v601, -inf
      %v646 = vsel %vm644, %v624, -inf
      %v647 = vmax.f32 %v645, %v646
      %648 = vmax.xlane.f32.xlu0 %v647
      %v649 = vpop.xlane.xlu0 %648
      %v650 = vsub.f32 %v601, %v649
      %v651 = vsub.f32 %v624, %v649
      %v652 = vmul.f32 %v650, 1.442695
      %v653 = vpow.pop %v652
      %v654 = vmul.f32 %v651, 1.442695
      %v655 = vpow.pop %v654
      %v656 = vsel %vm644, %v653, 0.0
      %v657 = vsel %vm644, %v655, 0.0
      %v658 = vadd.f32 %v656, %v657
      %659 = vadd.xlane.f32.xlu0 %v658
      %v660 = vpop.xlane.xlu0 %659
      %v661 = vrcp.pop %v660
      %v662 = vmul.f32 %v653, %v661
      %v663 = vmul.f32 %v655, %v661
      %666 = vst [vmem:[#allocation1] sm:$0xff] %v662
      %667 = vst [vmem:[#allocation1 + $0x9] sm:$0xff] %v663
      %s668 = scalar_lea.vmem [#allocation1], 1
      %v669 = vld [vmem:[%s668] ss:$9 sm:$0xff]
      %v671 = vlaneseq
      %vm672 = vcmp.ge.s32.totalorder %v671, 0
      %vm673 = vcmp.lt.s32.totalorder %v671, 256
      %vm674 = vmand %vm672, %vm673
      %675 = vst.msk [vmem:[%s315] sm:$0x3] %vm674, %v669
      %676 = vst [vmem:[#allocation1] sm:$0xff] %v662
      %677 = vst [vmem:[#allocation1 + $0x9] sm:$0xff] %v663
      %s678 = scalar_lea.vmem [#allocation1], 2
      %v679 = vld [vmem:[%s678] ss:$9 sm:$0xff]
      %681 = vst.msk [vmem:[%s319] sm:$0x3] %vm674, %v679
      %682 = vst [vmem:[#allocation1] sm:$0xff] %v662
      %683 = vst [vmem:[#allocation1 + $0x9] sm:$0xff] %v663
      %s684 = scalar_lea.vmem [#allocation1], 3
      %v685 = vld [vmem:[%s684] ss:$9 sm:$0xff]
      %687 = vst.msk [vmem:[%s323] sm:$0x3] %vm674, %v685
      %p688 = scmp.lt.s32.totalorder %s19, 1
      %s689 = scalar_select %p688, %s19, 1
      %s690 = smul.addr %s689, 2
      %s691 = smul.addr %s690, 4
      %s692 = scalar_lea.vmem %s3, %s691
      %p693 = scmp.lt.s32.totalorder %s19, 1
      %s694 = scalar_select %p693, %s19, 1
      %s695 = smul.addr %s694, 2
      %s696 = smul.addr %s695, 8
      %s697 = scalar_lea.vmem %s4, %s696
      %p698 = scmp.lt.s32.totalorder %s19, 1
      %s699 = scalar_select %p698, %s19, 1
      %s700 = smul.addr %s699, 2
      %s701 = scalar_lea.vmem %s5, %s700
      %p702 = scmp.lt.s32.totalorder %s19, 1
      %s703 = scalar_select %p702, %s19, 1
      %s704 = smul.addr %s703, 2
      %s705 = scalar_lea.vmem %s6, %s704
      %p706 = scmp.lt.s32.totalorder %s19, 1
      %s707 = scalar_select %p706, %s19, 1
      %s708 = smul.addr %s707, 2
      %s709 = scalar_lea.vmem %s7, %s708
      // Predicated region
      $region33: #{ca_model_forward.1} parent=31 // pred_check
        %p710 = pneg %p105
      $region34: #{ca_model_forward.1} parent=31 // pred_check_branch
        %712 = sbr.rel (%p710) target = $region36
      $region35: #{ca_model_forward.1} parent=31 // pred_region
        _
      $region36: #{ca_model_forward.1} parent=31 // pred_fallthru
        _
      // Predicated region
      $region37: #{ca_model_forward.1} parent=31 // pred_check
        %p713 = pneg %p131
      $region38: #{ca_model_forward.1} parent=31 // pred_check_branch
        %715 = sbr.rel (%p713) target = $region40
      $region39: #{ca_model_forward.1} parent=31 // pred_region
        _
      $region40: #{ca_model_forward.1} parent=31 // pred_fallthru
        _
      // Predicated region
      $region41: #{ca_model_forward.1} parent=31 // pred_check
        %p716 = pneg %p157
      $region42: #{ca_model_forward.1} parent=31 // pred_check_branch
        %718 = sbr.rel (%p716) target = $region44
      $region43: #{ca_model_forward.1} parent=31 // pred_region
        _
      $region44: #{ca_model_forward.1} parent=31 // pred_fallthru
        _
      // Predicated region
      $region45: #{ca_model_forward.1} parent=31 // pred_check
        %p719 = pneg %p183
      $region46: #{ca_model_forward.1} parent=31 // pred_check_branch
        %721 = sbr.rel (%p719) target = $region48
      $region47: #{ca_model_forward.1} parent=31 // pred_region
        _
      $region48: #{ca_model_forward.1} parent=31 // pred_fallthru
        _
      // Predicated region
      $region49: #{ca_model_forward.1} parent=31 // pred_check
        %p722 = pneg %p209
      $region50: #{ca_model_forward.1} parent=31 // pred_check_branch
        %724 = sbr.rel (%p722) target = $region52
      $region51: #{ca_model_forward.1} parent=31 // pred_region
        _
      $region52: #{ca_model_forward.1} parent=31 // pred_fallthru
        _
    $region32: #{ca_model_forward.1} parent=5 // pred_fallthru
      _
    %p725 = scmp.le.s32.totalorder 2, %s14
    // Predicated region
    $region53: #{ca_model_forward.1} parent=5 // pred_check
      %p726 = pneg %p725
    $region54: #{ca_model_forward.1} parent=5 // pred_check_branch
      %728 = sbr.rel (%p726) target = $region56
    $region55: #{ca_model_forward.1} parent=5 // pred_region
      %s729 = ssub.s32 %s14, 2
      // Predicated region
      $region57: #{ca_model_forward.1} parent=55 // pred_check
        %p730 = pneg %p111
      $region58: #{ca_model_forward.1} parent=55 // pred_check_branch
        %732 = sbr.rel (%p730) target = $region60
      $region59: #{ca_model_forward.1} parent=55 // pred_region
        %p733 = scmp.lt.s32.totalorder %s20, 1
        %s734 = scalar_select %p733, %s20, 1
        %s735 = smul.addr %s734, 2
        %s736 = smul.addr %s735, 4
        %s737 = scalar_lea.vmem %s3, %s736
      $region60: #{ca_model_forward.1} parent=55 // pred_fallthru
        _
      // Predicated region
      $region61: #{ca_model_forward.1} parent=55 // pred_check
        %p738 = pneg %p137
      $region62: #{ca_model_forward.1} parent=55 // pred_check_branch
        %740 = sbr.rel (%p738) target = $region64
      $region63: #{ca_model_forward.1} parent=55 // pred_region
        %p741 = scmp.lt.s32.totalorder %s20, 1
        %s742 = scalar_select %p741, %s20, 1
        %s743 = smul.addr %s742, 2
        %s744 = smul.addr %s743, 8
        %s745 = scalar_lea.vmem %s4, %s744
      $region64: #{ca_model_forward.1} parent=55 // pred_fallthru
        _
      // Predicated region
      $region65: #{ca_model_forward.1} parent=55 // pred_check
        %p746 = pneg %p163
      $region66: #{ca_model_forward.1} parent=55 // pred_check_branch
        %748 = sbr.rel (%p746) target = $region68
      $region67: #{ca_model_forward.1} parent=55 // pred_region
        %p749 = scmp.lt.s32.totalorder %s20, 1
        %s750 = scalar_select %p749, %s20, 1
        %s751 = smul.addr %s750, 2
        %s752 = scalar_lea.vmem %s5, %s751
      $region68: #{ca_model_forward.1} parent=55 // pred_fallthru
        _
      // Predicated region
      $region69: #{ca_model_forward.1} parent=55 // pred_check
        %p753 = pneg %p189
      $region70: #{ca_model_forward.1} parent=55 // pred_check_branch
        %755 = sbr.rel (%p753) target = $region72
      $region71: #{ca_model_forward.1} parent=55 // pred_region
        %p756 = scmp.lt.s32.totalorder %s20, 1
        %s757 = scalar_select %p756, %s20, 1
        %s758 = smul.addr %s757, 2
        %s759 = scalar_lea.vmem %s6, %s758
      $region72: #{ca_model_forward.1} parent=55 // pred_fallthru
        _
      // Predicated region
      $region73: #{ca_model_forward.1} parent=55 // pred_check
        %p760 = pneg %p215
      $region74: #{ca_model_forward.1} parent=55 // pred_check_branch
        %762 = sbr.rel (%p760) target = $region76
      $region75: #{ca_model_forward.1} parent=55 // pred_region
        %p763 = scmp.lt.s32.totalorder %s20, 1
        %s764 = scalar_select %p763, %s20, 1
        %s765 = smul.addr %s764, 2
        %s766 = scalar_lea.vmem %s7, %s765
      $region76: #{ca_model_forward.1} parent=55 // pred_fallthru
        _
    $region56: #{ca_model_forward.1} parent=5 // pred_fallthru
      _
  $region6: #{ca_model_forward.1} parent=0 // loop_footer
    %s18 = sadd.s32 1, %s14
  $region7: #{ca_model_forward.1} parent=0 // loop_footer_branch
    %13 = sbr.rel target = $region3
  $region8: #{ca_model_forward.1} parent=0 // loop_exit
    _

</llo_original>
